<compile_context>
chip_gen: v7x
topology: tpu7x:2x2x1
jax: 0.10.0
libtpu: 0.0.40
codegen_flags: <defaults>
</compile_context>

<pallas_src>
import math

import jax
import jax.numpy as jnp
import numpy as np
from jax.experimental import pallas as pl
from jax.experimental.pallas import tpu as pltpu


# ----------------------------- parameter setup (plain host-side glue) -----------------------------

def make_tuple(x):
    if isinstance(x, (tuple, list)):
        return tuple(x)
    assert isinstance(x, int)
    return (x,)


def _round_up(x, m):
    return ((x + m - 1) // m) * m


def build_sinusoidal_params(size, stride, embed_dim=768, logspace=False):
    """Reproduces SinusoidalEmbed.__init__ buffer construction."""
    size = make_tuple(size)
    stride = make_tuple(stride)
    assert len(size) < 4 and len(size) == len(stride)
    patches_resolution = [s // stride[i] for i, s in enumerate(size)]
    assert embed_dim % 2 == 0
    num_bands = math.ceil(embed_dim / (2 * len(size)))
    resolution = 10000.0
    if logspace:
        band = np.logspace(
            0.0, -math.log2(resolution / 2.0), num_bands + 1, base=2.0
        )[:-1]
    else:
        band = resolution ** (-np.linspace(0.0, 1.0, num_bands + 1)[:-1])
    band = band.astype(np.float32)
    # All rows of frequency_bands are identical; the full (num_dims, nb) buffer is
    # only needed by the pure-jnp reference.
    frequency_bands = np.stack([band for _ in range(len(size))], axis=0)
    return patches_resolution, band, jnp.asarray(frequency_bands, jnp.float32)


def build_projection(band, num_dims, embed_dim):
    """Host-precomputed B (num_dims, D_pad) and phase (1, D_pad).

    Column c of sin(pos @ B + phase) equals torch's
    cat([sin(features), cos(features)], -1).flatten(-2, -1)[..., c] for c < embed_dim
    (cos x == sin(x + pi/2)); columns >= embed_dim are zero and sliced off in the
    wrapper.  D_pad is a multiple of 128 so every kernel store is lane-dense
    (no masked vst.msk partial stores).
    """
    band = np.asarray(band, np.float32)
    nb = band.shape[0]
    d_pad = max(128, _round_up(embed_dim, 128))
    proj = np.zeros((num_dims, d_pad), np.float32)
    phase = np.zeros((1, d_pad), np.float32)
    for d in range(num_dims):
        base = d * 2 * nb
        for j in range(nb):
            c_sin = base + j
            c_cos = base + nb + j
            if c_sin < embed_dim:
                proj[d, c_sin] = band[j]
            if c_cos < embed_dim:          # truncation may cut mid-way through a cos block
                proj[d, c_cos] = band[j]
                phase[0, c_cos] = math.pi / 2.0
    return jnp.asarray(proj), jnp.asarray(phase)


def create_ndgrid(patches_resolution, normalized_coords=False):
    """(num_pos, num_dims) grid of patch coordinates (see NOTE above)."""
    axes = []
    for r in patches_resolution:
        if normalized_coords:
            axes.append(jnp.linspace(-1.0, 1.0, r, dtype=jnp.float32))
        else:
            axes.append(jnp.arange(r, dtype=jnp.float32))
    mesh = jnp.meshgrid(*axes, indexing="ij")
    grid = jnp.stack(mesh, axis=-1)  # (*res, num_dims)
    return grid.reshape(-1, len(patches_resolution))


# ----------------------------- Pallas kernel (hot path) -----------------------------

def _sinusoid_kernel(pos_ref, b_ref, phase_ref, o_ref):
    # pos_ref:   (tile_p, num_dims)  -- this step's row tile (pipelined)
    # b_ref:     (num_dims, D_pad)   -- resident (constant index_map)
    # phase_ref: (1, D_pad)          -- resident
    # o_ref:     (tile_p, D_pad)     -- lane-dense output tile
    pos = pos_ref[...]                               # (tile_p, num_dims) f32
    num_dims = b_ref.shape[0]                        # static, <= 3
    feat = phase_ref[...]                            # (1, D_pad)
    for d in range(num_dims):                        # unrolled, tiny
        # (tile_p, 1) * (1, D_pad) -> (tile_p, D_pad); full-f32 VPU accumulate.
        feat = feat + pos[:, d:d + 1] * b_ref[d:d + 1, :]
    # One transcendental per element, one unmasked lane-dense store (optionally bf16).
    o_ref[...] = jnp.sin(feat).astype(o_ref.dtype)


def _choose_tile_p(num_pos, d_pad, itemsize, target_bytes=1 << 20):
    """Tile rows sized by output bytes (~1 MiB/step), multiple of 16, >=2 blocks when possible."""
    rows_for_target = max(16, target_bytes // (d_pad * itemsize))
    tile_p = _round_up(min(rows_for_target, max(num_pos, 1)), 16)
    # Keep at least 2 grid steps when the problem has >= 32 rows so the "parallel"
    # row axis can shard across both v7x TensorCores (no-op on v5e/v6e).
    if num_pos >= 32:
        half = _round_up(-(-num_pos // 2), 16)
        tile_p = min(tile_p, half)
    return max(tile_p, 16)


def sinusoidal_embed(pos, proj, phase, embed_dim, out_dtype=jnp.float32,
                     target_tile_bytes=1 << 20):
    """pos: (num_pos, num_dims) f32; proj/phase from build_projection()."""
    num_pos, num_dims = pos.shape
    d_pad = proj.shape[1]
    assert proj.shape[0] == num_dims and phase.shape == (1, d_pad)
    assert d_pad % 128 == 0 and embed_dim <= d_pad

    itemsize = jnp.dtype(out_dtype).itemsize
    tile_p = _choose_tile_p(num_pos, d_pad, itemsize, target_tile_bytes)
    n_blocks = pl.cdiv(num_pos, tile_p)
    padded = n_blocks * tile_p
    if padded != num_pos:
        pos = jnp.pad(pos, ((0, padded - num_pos), (0, 0)))

    # VMEM budget (per-step, double-buffered): 2*(tile_p*d_pad*itemsize) output
    # + 2*(tile_p*512 B) lane-padded pos + tiny resident proj/phase — well under the
    # 16/32 MiB scoped defaults for the ~1 MiB target, so no vmem_limit_bytes needed.
    out = pl.pallas_call(
        _sinusoid_kernel,
        out_shape=jax.ShapeDtypeStruct((padded, d_pad), out_dtype),
        grid_spec=pltpu.PrefetchScalarGridSpec(
            num_scalar_prefetch=0,
            grid=(n_blocks,),
            in_specs=[
                # pos tiled per step; proj / phase stay resident (constant block index).
                pl.BlockSpec((tile_p, num_dims), lambda i: (i, 0)),
                pl.BlockSpec((num_dims, d_pad), lambda i: (0, 0)),
                pl.BlockSpec((1, d_pad), lambda i: (0, 0)),
            ],
            out_specs=pl.BlockSpec((tile_p, d_pad), lambda i: (i, 0)),
        ),
        compiler_params=pltpu.CompilerParams(
            dimension_semantics=("parallel",),   # shards the row axis across TCs (v7x)
        ),
    )(pos, proj, phase)

    # Only materialize a trimming pass when actually needed (embed_dim=768 / aligned
    # rows skip both slices entirely — avoids a second memory-bound XLA slice kernel).
    if padded != num_pos:
        out = out[:num_pos]
    if d_pad != embed_dim:
        out = out[:, :embed_dim]
    return out


# ----------------------------- reference (plain jnp, mirrors torch) -----------------------------

def sinusoidal_embed_ref(pos, frequency_bands, embed_dim):
    features = pos[..., None] * frequency_bands          # (num_pos, num_dims, num_bands)
    enc = jnp.concatenate([jnp.sin(features), jnp.cos(features)], axis=-1)
    enc = enc.reshape(pos.shape[0], -1)
    return enc[..., :embed_dim]


# ----------------------------- main -----------------------------

if __name__ == "__main__":
    # Case 1: 2D grid — size=(16,16), stride=(2,2) -> 8x8 patch grid -> 64 positions.
    size, stride, embed_dim = (16, 16), (2, 2), 32
    patches_resolution, band, freq_bands = build_sinusoidal_params(
        size, stride, embed_dim=embed_dim, logspace=False
    )
    num_dims = len(patches_resolution)
    proj, phase = build_projection(band, num_dims, embed_dim)

    # forward(): grid-coordinate path (f32 output — exact module semantics)
    grid_pos = create_ndgrid(patches_resolution, normalized_coords=False)  # (64, 2)
    out_grid = jax.block_until_ready(sinusoidal_embed(grid_pos, proj, phase, embed_dim))
    ref_grid = sinusoidal_embed_ref(grid_pos, freq_bands, embed_dim)
    assert out_grid.shape == (int(np.prod(patches_resolution)), embed_dim)
    assert out_grid.dtype == jnp.float32
    np.testing.assert_allclose(np.asarray(out_grid), np.asarray(ref_grid),
                               rtol=1e-5, atol=1e-5)

    # Same path with bf16 output (halves the store stream — v5e/v6e roofline win);
    # tolerance loosened for the expected bf16 rounding, not a semantic change.
    out_bf16 = jax.block_until_ready(
        sinusoidal_embed(grid_pos, proj, phase, embed_dim, out_dtype=jnp.bfloat16))
    assert out_bf16.dtype == jnp.bfloat16
    np.testing.assert_allclose(np.asarray(out_bf16, dtype=np.float32),
                               np.asarray(ref_grid), rtol=2e-2, atol=2e-2)

    # forward_with_x(): arbitrary-coordinate path, deterministic random positions
    key = jax.random.PRNGKey(0)
    x = jax.random.uniform(key, grid_pos.shape, jnp.float32, -1.0, 1.0)
    out_x = jax.block_until_ready(sinusoidal_embed(x, proj, phase, embed_dim))
    ref_x = sinusoidal_embed_ref(x, freq_bands, embed_dim)
    np.testing.assert_allclose(np.asarray(out_x), np.asarray(ref_x),
                               rtol=1e-5, atol=1e-5)

    # forward_with_x() with a ragged num_pos (exercises cdiv + tail padding path)
    x_ragged = jax.random.uniform(jax.random.PRNGKey(1), (70, num_dims),
                                  jnp.float32, -1.0, 1.0)
    out_r = jax.block_until_ready(sinusoidal_embed(x_ragged, proj, phase, embed_dim))
    ref_r = sinusoidal_embed_ref(x_ragged, freq_bands, embed_dim)
    np.testing.assert_allclose(np.asarray(out_r), np.asarray(ref_r),
                               rtol=1e-5, atol=1e-5)

    # Case 2: 3D grid where embed_dim % (2*num_dims) != 0 -> truncation cuts
    # mid-way through the last dim's cos block (matches torch slice semantics).
    size3, stride3, embed_dim3 = (8, 8, 8), (2, 2, 2), 32
    res3, band3, fb3 = build_sinusoidal_params(size3, stride3, embed_dim=embed_dim3)
    proj3, phase3 = build_projection(band3, len(res3), embed_dim3)
    pos3 = create_ndgrid(res3, normalized_coords=True)  # (64, 3)
    out3 = jax.block_until_ready(sinusoidal_embed(pos3, proj3, phase3, embed_dim3))
    ref3 = sinusoidal_embed_ref(pos3, fb3, embed_dim3)
    np.testing.assert_allclose(np.asarray(out3), np.asarray(ref3),
                               rtol=1e-5, atol=1e-5)

    print("KERNEL_OK")
</pallas_src>

<mosaic_0001>
module attributes {stable_mosaic.version = 11 : i64} {
  func.func @_sinusoid_kernel(%arg0: i32, %arg1: memref<32x2xf32, #tpu.memory_space<vmem>>, %arg2: memref<2x128xf32, #tpu.memory_space<vmem>>, %arg3: memref<1x128xf32, #tpu.memory_space<vmem>>, %arg4: memref<32x128xf32, #tpu.memory_space<vmem>>) attributes {dimension_semantics = [#tpu.dimension_semantics<parallel>], iteration_bounds = array<i64: 2>, scalar_prefetch = 0 : i64, scratch_operands = 0 : i64, tpu.core_type = #tpu.core_type<tc>, window_params = [{transform_indices = @transform_0, window_bounds = array<i64: 32, 2>}, {pipeline_mode = #tpu.pipeline_mode<synchronous>, transform_indices = @transform_1, window_bounds = array<i64: 2, 128>}, {pipeline_mode = #tpu.pipeline_mode<synchronous>, transform_indices = @transform_2, window_bounds = array<i64: 1, 128>}, {transform_indices = @transform_3, window_bounds = array<i64: 32, 128>}]} {
    %c0 = arith.constant 0 : index
    %c0_0 = arith.constant 0 : index
    %0 = vector.load %arg1[%c0, %c0_0] : memref<32x2xf32, #tpu.memory_space<vmem>>, vector<32x2xf32>
    %c0_1 = arith.constant 0 : index
    %c0_2 = arith.constant 0 : index
    %1 = vector.load %arg3[%c0_1, %c0_2] : memref<1x128xf32, #tpu.memory_space<vmem>>, vector<1x128xf32>
    %2 = vector.extract_strided_slice %0 {offsets = [0, 0], sizes = [32, 1], strides = [1, 1]} : vector<32x2xf32> to vector<32x1xf32>
    %c0_3 = arith.constant 0 : index
    %c0_4 = arith.constant 0 : index
    %3 = vector.load %arg2[%c0_3, %c0_4] : memref<2x128xf32, #tpu.memory_space<vmem>>, vector<1x128xf32>
    %4 = vector.broadcast %2 : vector<32x1xf32> to vector<32x128xf32>
    %5 = vector.broadcast %3 : vector<1x128xf32> to vector<32x128xf32>
    %6 = arith.mulf %4, %5 : vector<32x128xf32>
    %7 = vector.broadcast %1 : vector<1x128xf32> to vector<32x128xf32>
    %8 = arith.addf %7, %6 : vector<32x128xf32>
    %9 = vector.extract_strided_slice %0 {offsets = [0, 1], sizes = [32, 1], strides = [1, 1]} : vector<32x2xf32> to vector<32x1xf32>
    %c1 = arith.constant 1 : index
    %c0_5 = arith.constant 0 : index
    %10 = vector.load %arg2[%c1, %c0_5] : memref<2x128xf32, #tpu.memory_space<vmem>>, vector<1x128xf32>
    %11 = vector.broadcast %9 : vector<32x1xf32> to vector<32x128xf32>
    %12 = vector.broadcast %10 : vector<1x128xf32> to vector<32x128xf32>
    %13 = arith.mulf %11, %12 : vector<32x128xf32>
    %14 = arith.addf %8, %13 : vector<32x128xf32>
    %15 = math.sin %14 : vector<32x128xf32>
    %c0_6 = arith.constant 0 : index
    %c0_7 = arith.constant 0 : index
    %16 = vector.load %arg4[%c0_6, %c0_7] : memref<32x128xf32, #tpu.memory_space<vmem>>, vector<32x128xf32>
    tpu.vector_store %arg4[%c0_6, %c0_7], %15 {strides = array<i32>} : memref<32x128xf32, #tpu.memory_space<vmem>>, vector<32x128xf32>,
    return
  }
  func.func @transform_0(%arg0: i32) -> (i32, i32) {
    %c0_i32 = arith.constant 0 : i32
    %c0_i32_0 = arith.constant 0 : i32
    return %arg0, %c0_i32 : i32, i32
  }
  func.func @transform_1(%arg0: i32) -> (i32, i32) {
    %c0_i32 = arith.constant 0 : i32
    %c0_i32_0 = arith.constant 0 : i32
    %c0_i32_1 = arith.constant 0 : i32
    return %c0_i32, %c0_i32_0 : i32, i32
  }
  func.func @transform_2(%arg0: i32) -> (i32, i32) {
    %c0_i32 = arith.constant 0 : i32
    %c0_i32_0 = arith.constant 0 : i32
    %c0_i32_1 = arith.constant 0 : i32
    return %c0_i32, %c0_i32_0 : i32, i32
  }
  func.func @transform_3(%arg0: i32) -> (i32, i32) {
    %c0_i32 = arith.constant 0 : i32
    %c0_i32_0 = arith.constant 0 : i32
    return %arg0, %c0_i32 : i32, i32
  }
}

</mosaic_0001>

<llo_original>
// kernel: tpu_custom_call.1
$region0: #{tpu_custom_call.1}
  #allocation0 [shape = 'u32[]', space=smem, size = 0x4, offset = 0x4, fixed_abs, tag = 'smem constant byte address 0x4 - core index']
  #allocation1 [shape = 'u32[144,128]{1,0:T(1,128)}', space=vmem, size = 0x12000, scoped, tag = 'internal scratch']
  %s0 = inlined_call_operand.vmem [shape: f32[64,2], index: 0, kind: input, shape index: {}]
  %s1 = inlined_call_operand.vmem [shape: f32[2,128], index: 1, kind: input, shape index: {}]
  %s2 = inlined_call_operand.vmem [shape: f32[1,128], index: 2, kind: input, shape index: {}]
  %s3 = inlined_call_operand.hbm [shape: f32[64,128], index: 3, kind: output, shape index: {}]
  %s4 = sld [smem:[#allocation0]]
  $region45: #{tpu_custom_call.1} parent=0
    _
  %s6 = ssub.s32 1, %s4
  %s7 = scalar_select 0, %s6, %s4
  $region1: #{tpu_custom_call.1} parent=0
    #allocation2 [shape = 'u8[32768]{0}', space=vmem, size = 0x8000, scoped, tag = 'output window, operand 0']
    #allocation3 [shape = 's32[2]{0}', space=sflag, size = 0x8, scoped, tag = 'scoped memory for tpu_custom_call.1']
    %8 = vsyncpa [#allocation3], 0
    %s9 = scalar_lea.sflag [#allocation3], 1
    %10 = vsyncpa %s9, 0
    loop: start=0, step=1, limit=4
    $region2: #{tpu_custom_call.1} parent=1 // loop_pre_header
      _
    $region3: #{tpu_custom_call.1} parent=1 // loop_header
      %s12 = sphi 0, %s16
      %p13 = scmp.ge.s32.totalorder %s12, 4
      %s22 = sphi 0, %s24
      %s25 = sphi 0, %s22
      %s26 = sphi 0, %s25
      %s42 = sphi 0, %s26
      %s46 = sphi 0, %s46
      %s48 = sphi 0, %s46
      %s49 = sphi 0, %s48
      %s63 = sphi 0, %s49
      %s67 = sphi 0, %s67
      %s69 = sphi 0, %s67
      %s70 = sphi 0, %s69
      %s84 = sphi 0, %s70
      %s90 = sphi 0, %s92
      %s93 = sphi 0, %s90
      %s94 = sphi 0, %s93
      %s110 = sphi 0, %s94
    $region4: #{tpu_custom_call.1} parent=1 // loop_header_branch
      %15 = sbr.rel (%p13) target = $region8
    $region5: #{tpu_custom_call.1} parent=1 // loop_body
      %s17 = ssub.s32 %s12, 1
      %s18 = ssub.s32 %s12, 2
      %s19 = sadd.s32 %s12, 1
      %s20 = ssub.s32 %s12, %s19
      %p21 = scmp.eq.s32.totalorder %s20, 0
      %s23 = sadd.s32 %s22, 1
      %s24 = scalar_select %p21, %s22, %s23
      %p27 = pneg %p21
      %p28 = scmp.eq.s32.totalorder %s12, 1
      %p29 = por %p27, %p28
      %p30 = scmp.ne.s32.totalorder %s22, %s25
      %p31 = scmp.eq.s32.totalorder %s12, 0
      %p32 = por %p30, %p31
      %p33 = scmp.ne.s32.totalorder %s22, %s25
      %p34 = scmp.eq.s32.totalorder %s17, 1
      %p35 = por %p33, %p34
      %p36 = scmp.ne.s32.totalorder %s25, %s26
      %p37 = scmp.eq.s32.totalorder %s17, 0
      %p38 = por %p36, %p37
      %p39 = scmp.ne.s32.totalorder %s25, %s26
      %p40 = scmp.eq.s32.totalorder %s18, 1
      %p41 = por %p39, %p40
      %p43 = scmp.ne.s32.totalorder %s26, %s42
      %p44 = scmp.eq.s32.totalorder %s18, 0
      %p45 = por %p43, %p44
      %s47 = sadd.s32 %s46, 1
      %p50 = scmp.eq.s32.totalorder %s12, 1
      %p51 = scmp.ne.s32.totalorder %s46, %s48
      %p52 = scmp.eq.s32.totalorder %s12, 0
      %p53 = por %p51, %p52
      %p54 = scmp.ne.s32.totalorder %s46, %s48
      %p55 = scmp.eq.s32.totalorder %s17, 1
      %p56 = por %p54, %p55
      %p57 = scmp.ne.s32.totalorder %s48, %s49
      %p58 = scmp.eq.s32.totalorder %s17, 0
      %p59 = por %p57, %p58
      %p60 = scmp.ne.s32.totalorder %s48, %s49
      %p61 = scmp.eq.s32.totalorder %s18, 1
      %p62 = por %p60, %p61
      %p64 = scmp.ne.s32.totalorder %s49, %s63
      %p65 = scmp.eq.s32.totalorder %s18, 0
      %p66 = por %p64, %p65
      %s68 = sadd.s32 %s67, 1
      %p71 = scmp.eq.s32.totalorder %s12, 1
      %p72 = scmp.ne.s32.totalorder %s67, %s69
      %p73 = scmp.eq.s32.totalorder %s12, 0
      %p74 = por %p72, %p73
      %p75 = scmp.ne.s32.totalorder %s67, %s69
      %p76 = scmp.eq.s32.totalorder %s17, 1
      %p77 = por %p75, %p76
      %p78 = scmp.ne.s32.totalorder %s69, %s70
      %p79 = scmp.eq.s32.totalorder %s17, 0
      %p80 = por %p78, %p79
      %p81 = scmp.ne.s32.totalorder %s69, %s70
      %p82 = scmp.eq.s32.totalorder %s18, 1
      %p83 = por %p81, %p82
      %p85 = scmp.ne.s32.totalorder %s70, %s84
      %p86 = scmp.eq.s32.totalorder %s18, 0
      %p87 = por %p85, %p86
      %s88 = ssub.s32 %s12, %s19
      %p89 = scmp.eq.s32.totalorder %s88, 0
      %s91 = sadd.s32 %s90, 1
      %s92 = scalar_select %p89, %s90, %s91
      %p95 = pneg %p89
      %p96 = scmp.eq.s32.totalorder %s12, 1
      %p97 = por %p95, %p96
      %p98 = scmp.ne.s32.totalorder %s90, %s93
      %p99 = scmp.eq.s32.totalorder %s12, 0
      %p100 = por %p98, %p99
      %p101 = scmp.ne.s32.totalorder %s90, %s93
      %p102 = scmp.eq.s32.totalorder %s17, 1
      %p103 = por %p101, %p102
      %p104 = scmp.ne.s32.totalorder %s93, %s94
      %p105 = scmp.eq.s32.totalorder %s17, 0
      %p106 = por %p104, %p105
      %p107 = scmp.ne.s32.totalorder %s93, %s94
      %p108 = scmp.eq.s32.totalorder %s18, 1
      %p109 = por %p107, %p108
      %p111 = scmp.ne.s32.totalorder %s94, %s110
      %p112 = scmp.eq.s32.totalorder %s18, 0
      %p113 = por %p111, %p112
      %p114 = scmp.le.s32.totalorder 1, %s12
      %p115 = scmp.lt.s32.totalorder %s12, 3
      %p116 = pnand %p114, %p115
      %p117 = pneg %p116
      // Predicated region
      $region9: #{tpu_custom_call.1} parent=5 // pred_check
        _
      $region10: #{tpu_custom_call.1} parent=5 // pred_check_branch
        %119 = sbr.rel (%p116) target = $region12
      $region11: #{tpu_custom_call.1} parent=5 // pred_region
        %s120 = ssub.s32 %s12, 1
        // Predicated region
        $region13: #{tpu_custom_call.1} parent=11 // pred_check
          %p121 = pneg %p59
        $region14: #{tpu_custom_call.1} parent=11 // pred_check_branch
          %123 = sbr.rel (%p121) target = $region16
        $region15: #{tpu_custom_call.1} parent=11 // pred_region
          _
        $region16: #{tpu_custom_call.1} parent=11 // pred_fallthru
          _
        // Predicated region
        $region17: #{tpu_custom_call.1} parent=11 // pred_check
          %p124 = pneg %p80
        $region18: #{tpu_custom_call.1} parent=11 // pred_check_branch
          %126 = sbr.rel (%p124) target = $region20
        $region19: #{tpu_custom_call.1} parent=11 // pred_region
          _
        $region20: #{tpu_custom_call.1} parent=11 // pred_fallthru
          _
      $region12: #{tpu_custom_call.1} parent=5 // pred_fallthru
        _
      %p127 = scmp.lt.s32.totalorder %s12, 2
      // Predicated region
      $region21: #{tpu_custom_call.1} parent=5 // pred_check
        %p128 = pneg %p127
      $region22: #{tpu_custom_call.1} parent=5 // pred_check_branch
        %130 = sbr.rel (%p128) target = $region24
      $region23: #{tpu_custom_call.1} parent=5 // pred_region
        // Predicated region
        $region25: #{tpu_custom_call.1} parent=23 // pred_check
          %p131 = pneg %p32
        $region26: #{tpu_custom_call.1} parent=23 // pred_check_branch
          %133 = sbr.rel (%p131) target = $region28
        $region27: #{tpu_custom_call.1} parent=23 // pred_region
          %s134 = smul.u32 4, %s12
          %p135 = scmp.lt.s32.totalorder %s134, 7
          %s136 = scalar_select %p135, %s134, 7
          %s137 = smul.addr %s136, 8
          %s138 = scalar_lea.vmem %s0, %s137
          %s139 = smul.u32 4, %s12
        $region28: #{tpu_custom_call.1} parent=23 // pred_fallthru
          _
      $region24: #{tpu_custom_call.1} parent=5 // pred_fallthru
        _
      %p140 = scmp.le.s32.totalorder 1, %s12
      %p141 = scmp.lt.s32.totalorder %s12, 3
      %p142 = pnand %p140, %p141
      %p143 = pneg %p142
      // Predicated region
      $region29: #{tpu_custom_call.1} parent=5 // pred_check
        _
      $region30: #{tpu_custom_call.1} parent=5 // pred_check_branch
        %145 = sbr.rel (%p142) target = $region32
      $region31: #{tpu_custom_call.1} parent=5 // pred_region
        %s146 = ssub.s32 %s12, 1
        %s147 = smul.u32 4, %s17
        %p148 = scmp.lt.s32.totalorder %s147, 7
        %s149 = scalar_select %p148, %s147, 7
        %s150 = smul.addr %s149, 8
        %s151 = scalar_lea.vmem %s0, %s150
        %p152 = pneg %p38
        %p153 = pneg %p35
        %p154 = pneg %p59
        %p155 = pneg %p56
        %p156 = pneg %p80
        %p157 = pneg %p77
        %p158 = pneg %p106
        %p159 = pneg %p103
        %s160 = sand.u32 %s93, 1
        %s161 = scalar_lea.sflag [#allocation3], %s160
        %s162 = sand.u32 %s93, 1
        %s163 = smul.addr %s162, 32
        %s164 = scalar_lea.vmem [#allocation2], %s163
        %s165 = smul.u32 4, %s17
        %p166 = scmp.lt.s32.totalorder %s165, 7
        %s167 = scalar_select %p166, %s165, 7
        %s168 = smul.addr %s167, 8
        %s169 = scalar_lea.vmem %s0, %s168
        %s170 = smul.u32 4, %s17
        %s171 = smul.u32 4, %s17
        %v172 = vld [vmem:[%s169] sm:$0xff]
        %v173 = vld [vmem:[%s169 + $0x8] sm:$0xff]
        %v174 = vld [vmem:[%s169 + $0x10] sm:$0xff]
        %v175 = vld [vmem:[%s169 + $0x18] sm:$0xff]
        %v176 = vld [vmem:[%s2] sm:$0x1]
        %v177 = vld [vmem:[%s1] sm:$0x1]
        %179 = vset.pattern.permute.xlu0 0
        %180 = vperm.xlu0 %179, %v172
        %v181 = vpop.permute.xlu0 %180
        %184 = vset.pattern.permute.xlu0 0
        %185 = vperm.xlu0 %184, %v173
        %v186 = vpop.permute.xlu0 %185
        %189 = vset.pattern.permute.xlu0 0
        %190 = vperm.xlu0 %189, %v174
        %v191 = vpop.permute.xlu0 %190
        %194 = vset.pattern.permute.xlu0 0
        %195 = vperm.xlu0 %194, %v175
        %v196 = vpop.permute.xlu0 %195
        %v198 = vlaneseq
        %v199 = vshrl.u32 %v198, 7
        %v200 = vsub.s32 0, %v199
        %v201 = vrot.slane %v177, %v200
        %v202 = vmul.f32 %v181, %v201
        %v203 = vmul.f32 %v186, %v201
        %v204 = vmul.f32 %v191, %v201
        %v205 = vmul.f32 %v196, %v201
        %v207 = vlaneseq
        %v208 = vshrl.u32 %v207, 7
        %v209 = vsub.s32 0, %v208
        %v210 = vrot.slane %v176, %v209
        %v212 = vadd.f32 %v210, %v202
        %v213 = vadd.f32 %v210, %v203
        %v214 = vadd.f32 %v210, %v204
        %v215 = vadd.f32 %v210, %v205
        %v216 = vld [vmem:[%s1 + $0x1] sm:$0x1]
        %217 = vset.pattern.permute.xlu0 1
        %218 = vperm.xlu0 %217, %v172
        %v219 = vpop.permute.xlu0 %218
        %221 = vset.pattern.permute.xlu0 1
        %222 = vperm.xlu0 %221, %v173
        %v223 = vpop.permute.xlu0 %222
        %225 = vset.pattern.permute.xlu0 1
        %226 = vperm.xlu0 %225, %v174
        %v227 = vpop.permute.xlu0 %226
        %229 = vset.pattern.permute.xlu0 1
        %230 = vperm.xlu0 %229, %v175
        %v231 = vpop.permute.xlu0 %230
        %v233 = vlaneseq
        %v234 = vshrl.u32 %v233, 7
        %v235 = vsub.s32 0, %v234
        %v236 = vrot.slane %v216, %v235
        %v237 = vmul.f32 %v219, %v236
        %v238 = vmul.f32 %v223, %v236
        %v239 = vmul.f32 %v227, %v236
        %v240 = vmul.f32 %v231, %v236
        %v241 = vadd.f32 %v212, %v237
        %v242 = vadd.f32 %v213, %v238
        %v243 = vadd.f32 %v214, %v239
        %v244 = vadd.f32 %v215, %v240
        %v245 = vand.u32 2147483647, %v241
        %vm246 = vcmp.le.f32.partialorder %v245, 0.7853982
        %vm247 = vcmp.lt.s32.totalorder %v241, 0
        %v248 = vand.u32 %v241, 2139095040
        %v249 = vshrl.u32 %v248, 23
        %v250 = vsub.s32 %v249, 127
        %v251 = vand.u32 2147483647, %v241
        %v252 = vand.u32 %v251, 8388607
        %v253 = vor.u32 %v252, 8388608
        %v254 = vsub.s32 0, %v253
        %v255 = vadd.s32 %v250, 1
        %vm256 = vcmp.gt.s32.totalorder %v255, 0
        %v257 = vsel %vm256, %v255, 0
        %v258 = vshrl.u32 %v257, 5
        %v259 = vand.u32 %v257, 31
        %v260 = vsub.s32 32, %v259
        %v261 = vshrl.u32 683565275, %v260
        %v262 = vshll.u32 683565275, %v259
        %v263 = vshrl.u32 2475754826, %v260
        %v264 = vor.u32 %v262, %v263
        %v265 = vshll.u32 2475754826, %v259
        %v266 = vshrl.u32 2131351028, %v260
        %v267 = vor.u32 %v265, %v266
        %v268 = vshll.u32 2131351028, %v259
        %v269 = vshrl.u32 2102212464, %v260
        %v270 = vor.u32 %v268, %v269
        %v271 = vshll.u32 2102212464, %v259
        %v272 = vshrl.u32 920167782, %v260
        %v273 = vor.u32 %v271, %v272
        %v274 = vshll.u32 920167782, %v259
        %v275 = vshrl.u32 1326507024, %v260
        %v276 = vor.u32 %v274, %v275
        %vm277 = vcmp.lt.s32.totalorder %v258, 1
        %vm278 = vcmp.lt.s32.totalorder %v258, 2
        %vm279 = vcmp.lt.s32.totalorder %v258, 3
        %vm280 = vcmp.lt.s32.totalorder %v258, 4
        %v281 = vsel %vm277, %v261, %v264
        %v282 = vsel %vm280, %v270, 2102212464
        %v283 = vsel %vm279, %v267, %v282
        %v284 = vsel %vm278, %v281, %v283
        %v285 = vsel %vm277, %v264, %v267
        %v286 = vsel %vm280, %v273, 920167782
        %v287 = vsel %vm279, %v270, %v286
        %v288 = vsel %vm278, %v285, %v287
        %v289 = vsel %vm277, %v267, %v270
        %v290 = vsel %vm280, %v276, 1326507024
        %v291 = vsel %vm279, %v273, %v290
        %v292 = vsel %vm278, %v289, %v291
        %v293 = vshll.u32 %v253, 8
        %v294 = vmul.u32.u64.compose %v293, %v292
        %v295 = vextract.low.u32 %v294
        %v296 = vextract.high.u32 %v294
        %v297 = vmul.u32.u64.compose %v293, %v288
        %v298 = vextract.low.u32 %v297
        %v299 = vextract.high.u32 %v297
        %v300 = vmul.u32 %v293, %v284
        %v301 = vadd.s32 %v296, %v298
        %vm302 = vc.u32 %v296, %v298
        %v303 = vadd.s32 %v299, 1
        %v304 = vsel %vm302, %v303, %v299
        %v305 = vadd.s32 %v300, %v304
        %v306 = vadd.s32 %v305, 536870912
        %v307 = vshrl.u32 %v306, 30
        %v308 = vshll.u32 %v307, 30
        %v309 = vsub.s32 %v305, %v308
        %vm310 = vcmp.lt.s32.totalorder %v309, 0
        %v311 = vsub.s32 0, %v309
        %v312 = vsel %vm310, %v311, %v309
        %v313 = vclz %v312
        %v314 = vsub.s32 %v313, 2
        %vm315 = vcmp.gt.s32.totalorder 0, %v314
        %v316 = vsel %vm315, 0, %v314
        %v317 = vsub.s32 32, %v316
        %v318 = vshll.u32 %v309, %v316
        %v319 = vshrl.u32 %v301, %v317
        %v320 = vor.u32 %v318, %v319
        %v321 = vsub.s32 4294967266, %v316
        %v322 = vadd.s32 %v321, 127
        %v323 = vshll.u32 %v322, 23
        %v324 = vor.u32 4788187, %v323
        %v325 = vand.u32 2147483647, %v324
        %v327 = vcvt.s32.f32 %v320
        %v328 = vmul.f32 %v327, %v325
        %v329 = vxor.u32 %v328, 2147483648
        %v330 = vsel %vm247, %v329, %v328
        %v331 = vsub.s32 4, %v307
        %v332 = vsel %vm247, %v331, %v307
        %v333 = vsel %vm246, %v241, %v330
        %v334 = vsel %vm246, 0, %v332
        %v335 = vcosq.f32.pop %v333
        %v336 = vsinq.f32.pop %v333
        %vm337 = vweird.f32 %v241
        %v338 = vadd.s32 %v334, 3
        %v339 = vand.u32 %v338, 3
        %vm340 = vcmp.lt.s32.totalorder %v339, 2
        %vm341 = vcmp.eq.s32.totalorder %v339, 0
        %v342 = vxor.u32 %v336, 2147483648
        %v343 = vsel %vm341, %v335, %v342
        %vm344 = vcmp.eq.s32.totalorder %v339, 2
        %v345 = vxor.u32 %v335, 2147483648
        %v346 = vsel %vm344, %v345, %v336
        %v347 = vsel %vm340, %v343, %v346
        %v348 = vsel %vm337, nan, %v347
        %v349 = vand.u32 2147483647, %v242
        %vm350 = vcmp.le.f32.partialorder %v349, 0.7853982
        %vm351 = vcmp.lt.s32.totalorder %v242, 0
        %v352 = vand.u32 %v242, 2139095040
        %v353 = vshrl.u32 %v352, 23
        %v354 = vsub.s32 %v353, 127
        %v355 = vand.u32 2147483647, %v242
        %v356 = vand.u32 %v355, 8388607
        %v357 = vor.u32 %v356, 8388608
        %v358 = vsub.s32 0, %v357
        %v359 = vadd.s32 %v354, 1
        %vm360 = vcmp.gt.s32.totalorder %v359, 0
        %v361 = vsel %vm360, %v359, 0
        %v362 = vshrl.u32 %v361, 5
        %v363 = vand.u32 %v361, 31
        %v364 = vsub.s32 32, %v363
        %v365 = vshrl.u32 683565275, %v364
        %v366 = vshll.u32 683565275, %v363
        %v367 = vshrl.u32 2475754826, %v364
        %v368 = vor.u32 %v366, %v367
        %v369 = vshll.u32 2475754826, %v363
        %v370 = vshrl.u32 2131351028, %v364
        %v371 = vor.u32 %v369, %v370
        %v372 = vshll.u32 2131351028, %v363
        %v373 = vshrl.u32 2102212464, %v364
        %v374 = vor.u32 %v372, %v373
        %v375 = vshll.u32 2102212464, %v363
        %v376 = vshrl.u32 920167782, %v364
        %v377 = vor.u32 %v375, %v376
        %v378 = vshll.u32 920167782, %v363
        %v379 = vshrl.u32 1326507024, %v364
        %v380 = vor.u32 %v378, %v379
        %vm381 = vcmp.lt.s32.totalorder %v362, 1
        %vm382 = vcmp.lt.s32.totalorder %v362, 2
        %vm383 = vcmp.lt.s32.totalorder %v362, 3
        %vm384 = vcmp.lt.s32.totalorder %v362, 4
        %v385 = vsel %vm381, %v365, %v368
        %v386 = vsel %vm384, %v374, 2102212464
        %v387 = vsel %vm383, %v371, %v386
        %v388 = vsel %vm382, %v385, %v387
        %v389 = vsel %vm381, %v368, %v371
        %v390 = vsel %vm384, %v377, 920167782
        %v391 = vsel %vm383, %v374, %v390
        %v392 = vsel %vm382, %v389, %v391
        %v393 = vsel %vm381, %v371, %v374
        %v394 = vsel %vm384, %v380, 1326507024
        %v395 = vsel %vm383, %v377, %v394
        %v396 = vsel %vm382, %v393, %v395
        %v397 = vshll.u32 %v357, 8
        %v398 = vmul.u32.u64.compose %v397, %v396
        %v399 = vextract.low.u32 %v398
        %v400 = vextract.high.u32 %v398
        %v401 = vmul.u32.u64.compose %v397, %v392
        %v402 = vextract.low.u32 %v401
        %v403 = vextract.high.u32 %v401
        %v404 = vmul.u32 %v397, %v388
        %v405 = vadd.s32 %v400, %v402
        %vm406 = vc.u32 %v400, %v402
        %v407 = vadd.s32 %v403, 1
        %v408 = vsel %vm406, %v407, %v403
        %v409 = vadd.s32 %v404, %v408
        %v410 = vadd.s32 %v409, 536870912
        %v411 = vshrl.u32 %v410, 30
        %v412 = vshll.u32 %v411, 30
        %v413 = vsub.s32 %v409, %v412
        %vm414 = vcmp.lt.s32.totalorder %v413, 0
        %v415 = vsub.s32 0, %v413
        %v416 = vsel %vm414, %v415, %v413
        %v417 = vclz %v416
        %v418 = vsub.s32 %v417, 2
        %vm419 = vcmp.gt.s32.totalorder 0, %v418
        %v420 = vsel %vm419, 0, %v418
        %v421 = vsub.s32 32, %v420
        %v422 = vshll.u32 %v413, %v420
        %v423 = vshrl.u32 %v405, %v421
        %v424 = vor.u32 %v422, %v423
        %v425 = vsub.s32 4294967266, %v420
        %v426 = vadd.s32 %v425, 127
        %v427 = vshll.u32 %v426, 23
        %v428 = vor.u32 4788187, %v427
        %v429 = vand.u32 2147483647, %v428
        %v431 = vcvt.s32.f32 %v424
        %v432 = vmul.f32 %v431, %v429
        %v433 = vxor.u32 %v432, 2147483648
        %v434 = vsel %vm351, %v433, %v432
        %v435 = vsub.s32 4, %v411
        %v436 = vsel %vm351, %v435, %v411
        %v437 = vsel %vm350, %v242, %v434
        %v438 = vsel %vm350, 0, %v436
        %v439 = vcosq.f32.pop %v437
        %v440 = vsinq.f32.pop %v437
        %vm441 = vweird.f32 %v242
        %v442 = vadd.s32 %v438, 3
        %v443 = vand.u32 %v442, 3
        %vm444 = vcmp.lt.s32.totalorder %v443, 2
        %vm445 = vcmp.eq.s32.totalorder %v443, 0
        %v446 = vxor.u32 %v440, 2147483648
        %v447 = vsel %vm445, %v439, %v446
        %vm448 = vcmp.eq.s32.totalorder %v443, 2
        %v449 = vxor.u32 %v439, 2147483648
        %v450 = vsel %vm448, %v449, %v440
        %v451 = vsel %vm444, %v447, %v450
        %v452 = vsel %vm441, nan, %v451
        %v453 = vand.u32 2147483647, %v243
        %vm454 = vcmp.le.f32.partialorder %v453, 0.7853982
        %vm455 = vcmp.lt.s32.totalorder %v243, 0
        %v456 = vand.u32 %v243, 2139095040
        %v457 = vshrl.u32 %v456, 23
        %v458 = vsub.s32 %v457, 127
        %v459 = vand.u32 2147483647, %v243
        %v460 = vand.u32 %v459, 8388607
        %v461 = vor.u32 %v460, 8388608
        %v462 = vsub.s32 0, %v461
        %v463 = vadd.s32 %v458, 1
        %vm464 = vcmp.gt.s32.totalorder %v463, 0
        %v465 = vsel %vm464, %v463, 0
        %v466 = vshrl.u32 %v465, 5
        %v467 = vand.u32 %v465, 31
        %v468 = vsub.s32 32, %v467
        %v469 = vshrl.u32 683565275, %v468
        %v470 = vshll.u32 683565275, %v467
        %v471 = vshrl.u32 2475754826, %v468
        %v472 = vor.u32 %v470, %v471
        %v473 = vshll.u32 2475754826, %v467
        %v474 = vshrl.u32 2131351028, %v468
        %v475 = vor.u32 %v473, %v474
        %v476 = vshll.u32 2131351028, %v467
        %v477 = vshrl.u32 2102212464, %v468
        %v478 = vor.u32 %v476, %v477
        %v479 = vshll.u32 2102212464, %v467
        %v480 = vshrl.u32 920167782, %v468
        %v481 = vor.u32 %v479, %v480
        %v482 = vshll.u32 920167782, %v467
        %v483 = vshrl.u32 1326507024, %v468
        %v484 = vor.u32 %v482, %v483
        %vm485 = vcmp.lt.s32.totalorder %v466, 1
        %vm486 = vcmp.lt.s32.totalorder %v466, 2
        %vm487 = vcmp.lt.s32.totalorder %v466, 3
        %vm488 = vcmp.lt.s32.totalorder %v466, 4
        %v489 = vsel %vm485, %v469, %v472
        %v490 = vsel %vm488, %v478, 2102212464
        %v491 = vsel %vm487, %v475, %v490
        %v492 = vsel %vm486, %v489, %v491
        %v493 = vsel %vm485, %v472, %v475
        %v494 = vsel %vm488, %v481, 920167782
        %v495 = vsel %vm487, %v478, %v494
        %v496 = vsel %vm486, %v493, %v495
        %v497 = vsel %vm485, %v475, %v478
        %v498 = vsel %vm488, %v484, 1326507024
        %v499 = vsel %vm487, %v481, %v498
        %v500 = vsel %vm486, %v497, %v499
        %v501 = vshll.u32 %v461, 8
        %v502 = vmul.u32.u64.compose %v501, %v500
        %v503 = vextract.low.u32 %v502
        %v504 = vextract.high.u32 %v502
        %v505 = vmul.u32.u64.compose %v501, %v496
        %v506 = vextract.low.u32 %v505
        %v507 = vextract.high.u32 %v505
        %v508 = vmul.u32 %v501, %v492
        %v509 = vadd.s32 %v504, %v506
        %vm510 = vc.u32 %v504, %v506
        %v511 = vadd.s32 %v507, 1
        %v512 = vsel %vm510, %v511, %v507
        %v513 = vadd.s32 %v508, %v512
        %v514 = vadd.s32 %v513, 536870912
        %v515 = vshrl.u32 %v514, 30
        %v516 = vshll.u32 %v515, 30
        %v517 = vsub.s32 %v513, %v516
        %vm518 = vcmp.lt.s32.totalorder %v517, 0
        %v519 = vsub.s32 0, %v517
        %v520 = vsel %vm518, %v519, %v517
        %v521 = vclz %v520
        %v522 = vsub.s32 %v521, 2
        %vm523 = vcmp.gt.s32.totalorder 0, %v522
        %v524 = vsel %vm523, 0, %v522
        %v525 = vsub.s32 32, %v524
        %v526 = vshll.u32 %v517, %v524
        %v527 = vshrl.u32 %v509, %v525
        %v528 = vor.u32 %v526, %v527
        %v529 = vsub.s32 4294967266, %v524
        %v530 = vadd.s32 %v529, 127
        %v531 = vshll.u32 %v530, 23
        %v532 = vor.u32 4788187, %v531
        %v533 = vand.u32 2147483647, %v532
        %v535 = vcvt.s32.f32 %v528
        %v536 = vmul.f32 %v535, %v533
        %v537 = vxor.u32 %v536, 2147483648
        %v538 = vsel %vm455, %v537, %v536
        %v539 = vsub.s32 4, %v515
        %v540 = vsel %vm455, %v539, %v515
        %v541 = vsel %vm454, %v243, %v538
        %v542 = vsel %vm454, 0, %v540
        %v543 = vcosq.f32.pop %v541
        %v544 = vsinq.f32.pop %v541
        %vm545 = vweird.f32 %v243
        %v546 = vadd.s32 %v542, 3
        %v547 = vand.u32 %v546, 3
        %vm548 = vcmp.lt.s32.totalorder %v547, 2
        %vm549 = vcmp.eq.s32.totalorder %v547, 0
        %v550 = vxor.u32 %v544, 2147483648
        %v551 = vsel %vm549, %v543, %v550
        %vm552 = vcmp.eq.s32.totalorder %v547, 2
        %v553 = vxor.u32 %v543, 2147483648
        %v554 = vsel %vm552, %v553, %v544
        %v555 = vsel %vm548, %v551, %v554
        %v556 = vsel %vm545, nan, %v555
        %v557 = vand.u32 2147483647, %v244
        %vm558 = vcmp.le.f32.partialorder %v557, 0.7853982
        %vm559 = vcmp.lt.s32.totalorder %v244, 0
        %v560 = vand.u32 %v244, 2139095040
        %v561 = vshrl.u32 %v560, 23
        %v562 = vsub.s32 %v561, 127
        %v563 = vand.u32 2147483647, %v244
        %v564 = vand.u32 %v563, 8388607
        %v565 = vor.u32 %v564, 8388608
        %v566 = vsub.s32 0, %v565
        %v567 = vadd.s32 %v562, 1
        %vm568 = vcmp.gt.s32.totalorder %v567, 0
        %v569 = vsel %vm568, %v567, 0
        %v570 = vshrl.u32 %v569, 5
        %v571 = vand.u32 %v569, 31
        %v572 = vsub.s32 32, %v571
        %v573 = vshrl.u32 683565275, %v572
        %v574 = vshll.u32 683565275, %v571
        %v575 = vshrl.u32 2475754826, %v572
        %v576 = vor.u32 %v574, %v575
        %v577 = vshll.u32 2475754826, %v571
        %v578 = vshrl.u32 2131351028, %v572
        %v579 = vor.u32 %v577, %v578
        %v580 = vshll.u32 2131351028, %v571
        %v581 = vshrl.u32 2102212464, %v572
        %v582 = vor.u32 %v580, %v581
        %v583 = vshll.u32 2102212464, %v571
        %v584 = vshrl.u32 920167782, %v572
        %v585 = vor.u32 %v583, %v584
        %v586 = vshll.u32 920167782, %v571
        %v587 = vshrl.u32 1326507024, %v572
        %v588 = vor.u32 %v586, %v587
        %vm589 = vcmp.lt.s32.totalorder %v570, 1
        %vm590 = vcmp.lt.s32.totalorder %v570, 2
        %vm591 = vcmp.lt.s32.totalorder %v570, 3
        %vm592 = vcmp.lt.s32.totalorder %v570, 4
        %v593 = vsel %vm589, %v573, %v576
        %v594 = vsel %vm592, %v582, 2102212464
        %v595 = vsel %vm591, %v579, %v594
        %v596 = vsel %vm590, %v593, %v595
        %v597 = vsel %vm589, %v576, %v579
        %v598 = vsel %vm592, %v585, 920167782
        %v599 = vsel %vm591, %v582, %v598
        %v600 = vsel %vm590, %v597, %v599
        %v601 = vsel %vm589, %v579, %v582
        %v602 = vsel %vm592, %v588, 1326507024
        %v603 = vsel %vm591, %v585, %v602
        %v604 = vsel %vm590, %v601, %v603
        %v605 = vshll.u32 %v565, 8
        %v606 = vmul.u32.u64.compose %v605, %v604
        %v607 = vextract.low.u32 %v606
        %v608 = vextract.high.u32 %v606
        %v609 = vmul.u32.u64.compose %v605, %v600
        %v610 = vextract.low.u32 %v609
        %v611 = vextract.high.u32 %v609
        %v612 = vmul.u32 %v605, %v596
        %v613 = vadd.s32 %v608, %v610
        %vm614 = vc.u32 %v608, %v610
        %v615 = vadd.s32 %v611, 1
        %v616 = vsel %vm614, %v615, %v611
        %v617 = vadd.s32 %v612, %v616
        %v618 = vadd.s32 %v617, 536870912
        %v619 = vshrl.u32 %v618, 30
        %v620 = vshll.u32 %v619, 30
        %v621 = vsub.s32 %v617, %v620
        %vm622 = vcmp.lt.s32.totalorder %v621, 0
        %v623 = vsub.s32 0, %v621
        %v624 = vsel %vm622, %v623, %v621
        %v625 = vclz %v624
        %v626 = vsub.s32 %v625, 2
        %vm627 = vcmp.gt.s32.totalorder 0, %v626
        %v628 = vsel %vm627, 0, %v626
        %v629 = vsub.s32 32, %v628
        %v630 = vshll.u32 %v621, %v628
        %v631 = vshrl.u32 %v613, %v629
        %v632 = vor.u32 %v630, %v631
        %v633 = vsub.s32 4294967266, %v628
        %v634 = vadd.s32 %v633, 127
        %v635 = vshll.u32 %v634, 23
        %v636 = vor.u32 4788187, %v635
        %v637 = vand.u32 2147483647, %v636
        %v639 = vcvt.s32.f32 %v632
        %v640 = vmul.f32 %v639, %v637
        %v641 = vxor.u32 %v640, 2147483648
        %v642 = vsel %vm559, %v641, %v640
        %v643 = vsub.s32 4, %v619
        %v644 = vsel %vm559, %v643, %v619
        %v645 = vsel %vm558, %v244, %v642
        %v646 = vsel %vm558, 0, %v644
        %v647 = vcosq.f32.pop %v645
        %v648 = vsinq.f32.pop %v645
        %vm649 = vweird.f32 %v244
        %v650 = vadd.s32 %v646, 3
        %v651 = vand.u32 %v650, 3
        %vm652 = vcmp.lt.s32.totalorder %v651, 2
        %vm653 = vcmp.eq.s32.totalorder %v651, 0
        %v654 = vxor.u32 %v648, 2147483648
        %v655 = vsel %vm653, %v647, %v654
        %vm656 = vcmp.eq.s32.totalorder %v651, 2
        %v657 = vxor.u32 %v647, 2147483648
        %v658 = vsel %vm656, %v657, %v648
        %v659 = vsel %vm652, %v655, %v658
        %v660 = vsel %vm649, nan, %v659
        %661 = vst [vmem:[%s164] sm:$0xff] %v348
        %662 = vst [vmem:[%s164 + $0x8] sm:$0xff] %v452
        %663 = vst [vmem:[%s164 + $0x10] sm:$0xff] %v556
        %664 = vst [vmem:[%s164 + $0x18] sm:$0xff] %v660
        %s665 = sand.u32 %s93, 1
        %s666 = scalar_lea.sflag [#allocation3], %s665
        %s667 = sand.u32 %s93, 1
        %s668 = smul.addr %s667, 32
        %s669 = scalar_lea.vmem [#allocation2], %s668
        // Predicated region
        $region33: #{tpu_custom_call.1} parent=31 // pred_check
          %p670 = pneg %p103
        $region34: #{tpu_custom_call.1} parent=31 // pred_check_branch
          %672 = sbr.rel (%p670) target = $region36
        $region35: #{tpu_custom_call.1} parent=31 // pred_region
          %s673 = smul.u32 4, %s17
          %s675 = ssub.s32 512, 512
          %676 = vsyncadd %s666, %s675
          %s677 = smul.addr %s673, 128
          %s678 = scalar_lea.hbm %s3, %s677
          %s679 = sshll.u32 %s669, 4
          %s680 = int_to_ptr.vmem [resolvable:$true] %s679
          %685 = dma.vmem_to_hbm [thread:$0]  %s680, 512, %s678, %s666, 128, 128, 8
        $region36: #{tpu_custom_call.1} parent=31 // pred_fallthru
          _
      $region32: #{tpu_custom_call.1} parent=5 // pred_fallthru
        _
      %p686 = scmp.le.s32.totalorder 2, %s12
      // Predicated region
      $region37: #{tpu_custom_call.1} parent=5 // pred_check
        %p687 = pneg %p686
      $region38: #{tpu_custom_call.1} parent=5 // pred_check_branch
        %689 = sbr.rel (%p687) target = $region40
      $region39: #{tpu_custom_call.1} parent=5 // pred_region
        %s690 = ssub.s32 %s12, 2
        // Predicated region
        $region41: #{tpu_custom_call.1} parent=39 // pred_check
          %p691 = pneg %p109
        $region42: #{tpu_custom_call.1} parent=39 // pred_check_branch
          %693 = sbr.rel (%p691) target = $region44
        $region43: #{tpu_custom_call.1} parent=39 // pred_region
          %s694 = sand.u32 %s94, 1
          %s695 = scalar_lea.sflag [#allocation3], %s694
          %s696 = sand.u32 %s94, 1
          %s697 = smul.addr %s696, 32
          %s698 = scalar_lea.vmem [#allocation2], %s697
          %699 = dma.done %s695, 512
        $region44: #{tpu_custom_call.1} parent=39 // pred_fallthru
          _
      $region40: #{tpu_custom_call.1} parent=5 // pred_fallthru
        _
    $region6: #{tpu_custom_call.1} parent=1 // loop_footer
      %s16 = sadd.s32 1, %s12
    $region7: #{tpu_custom_call.1} parent=1 // loop_footer_branch
      %11 = sbr.rel target = $region3
    $region8: #{tpu_custom_call.1} parent=1 // loop_exit
      _
    %700 = vsyncpa [#allocation3], 1
    %s701 = scalar_lea.sflag [#allocation3], 1
    %702 = vsyncpa %s701, 1

</llo_original>
